<compile_context>
chip_gen: v5e
topology: v5e:2x2
jax: 0.10.0
libtpu: 0.0.40
codegen_flags: <defaults>
</compile_context>

<pallas_src>
import jax
import jax.numpy as jnp
from jax import lax
from jax.experimental import pallas as pl
from jax.experimental.pallas import tpu as pltpu


def _gram_kernel(x_ref, y_ref, g_ref):
    # t = x @ y^T : contract last dims of both operands (MXU-native, no
    # transpose of y inserted).
    t = lax.dot_general(
        x_ref[...],
        y_ref[...],
        dimension_numbers=(((1,), (1,)), ((), ())),
        preferred_element_type=jnp.float32,
    )
    # G = t @ t^T : second MXU op on the VMEM-resident intermediate; only the
    # 32x32 Gram matrix (4 KiB) is written back to HBM.
    g_ref[...] = lax.dot_general(
        t,
        t,
        dimension_numbers=(((1,), (1,)), ((), ())),
        preferred_element_type=jnp.float32,
    )


def gram_of_xyT(x, y):
    """Return G = (x @ y^T) @ (x @ y^T)^T from a single gridless Pallas call."""
    M, K = x.shape
    N, K2 = y.shape
    assert K == K2, "inner dims must match"

    # Gridless full-array-in-VMEM path; only valid while everything fits the
    # scoped-VMEM budget (16 MiB default on v5e, 32 MiB on v6e/v7x).
    # TODO(synk): add a tiled grid fallback (tm=tn=128, tk=512, f32 acc
    # scratch, dimension_semantics=('parallel','parallel','arbitrary'),
    # tile sizes derived from pltpu.get_tpu_info()) for large shapes.
    footprint = 4 * (M * K + N * K + M * M)
    assert footprint < 8 * 1024 * 1024, "shapes too large for gridless VMEM path"

    flops = 2 * M * K * N + 2 * M * N * M
    return pl.pallas_call(
        _gram_kernel,
        out_shape=jax.ShapeDtypeStruct((M, M), jnp.float32),
        in_specs=[
            pl.BlockSpec(memory_space=pltpu.MemorySpace.VMEM),
            pl.BlockSpec(memory_space=pltpu.MemorySpace.VMEM),
        ],
        out_specs=pl.BlockSpec(memory_space=pltpu.MemorySpace.VMEM),
        cost_estimate=pl.CostEstimate(
            flops=flops, transcendentals=0, bytes_accessed=footprint
        ),
    )(x, y)


def pa_measure(x, y):
    """Equivalent of PA_Measure.forward(x, y): sum of singular values of x @ y^T."""
    g = gram_of_xyT(x, y)
    # TODO(synk): the symmetric eigensolve has no Pallas/TPU-kernel
    # equivalent; it runs as a (cheap, 32x32) jnp.linalg.eigvalsh.
    ev = jnp.linalg.eigvalsh(g)
    return jnp.sum(jnp.sqrt(jnp.maximum(ev, 0.0)))


if __name__ == "__main__":
    key = jax.random.PRNGKey(0)
    kx, ky = jax.random.split(key)
    M, K, N = 32, 64, 32
    x = jax.random.normal(kx, (M, K), dtype=jnp.float32)
    y = jax.random.normal(ky, (N, K), dtype=jnp.float32)

    out = pa_measure(x, y)
    jax.block_until_ready(out)

    # Sanity check against a pure-JAX reference of the PyTorch forward.
    ref = jnp.sum(jnp.linalg.svd(x @ y.T, compute_uv=False))
    assert jnp.allclose(out, ref, rtol=1e-4, atol=1e-4), (out, ref)

    print("KERNEL_OK")
</pallas_src>

<mosaic_0001>
module attributes {stable_mosaic.version = 11 : i64} {
  func.func @_gram_kernel(%arg0: memref<32x64xf32, #tpu.memory_space<vmem>>, %arg1: memref<32x64xf32, #tpu.memory_space<vmem>>, %arg2: memref<32x32xf32, #tpu.memory_space<vmem>>) attributes {dimension_semantics = [], scalar_prefetch = 0 : i64, scratch_operands = 0 : i64, tpu.core_type = #tpu.core_type<tc>} {
    %c0 = arith.constant 0 : index
    %c0_0 = arith.constant 0 : index
    %0 = vector.load %arg0[%c0, %c0_0] : memref<32x64xf32, #tpu.memory_space<vmem>>, vector<32x64xf32>
    %c0_1 = arith.constant 0 : index
    %c0_2 = arith.constant 0 : index
    %1 = vector.load %arg1[%c0_1, %c0_2] : memref<32x64xf32, #tpu.memory_space<vmem>>, vector<32x64xf32>
    %cst = arith.constant dense<0.000000e+00> : vector<32x32xf32>
    %2 = tpu.matmul %0, %1, %cst {dimension_numbers = #tpu.dot_dimension_numbers<[1], [1], [0], [0], [0, 0, 1, 0], [], []>} : vector<32x64xf32>, vector<32x64xf32>, vector<32x32xf32> -> vector<32x32xf32>
    %cst_3 = arith.constant dense<0.000000e+00> : vector<32x32xf32>
    %3 = tpu.matmul %2, %2, %cst_3 {dimension_numbers = #tpu.dot_dimension_numbers<[1], [1], [0], [0], [0, 0, 1, 0], [], []>} : vector<32x32xf32>, vector<32x32xf32>, vector<32x32xf32> -> vector<32x32xf32>
    %c0_4 = arith.constant 0 : index
    %c0_5 = arith.constant 0 : index
    %4 = vector.load %arg2[%c0_4, %c0_5] : memref<32x32xf32, #tpu.memory_space<vmem>>, vector<32x32xf32>
    tpu.vector_store %arg2[%c0_4, %c0_5], %3 {strides = array<i32>} : memref<32x32xf32, #tpu.memory_space<vmem>>, vector<32x32xf32>,
    return
  }
}

</mosaic_0001>

<llo_original>
// kernel: tpu_custom_call.1
$region0: #{tpu_custom_call.1}
  #allocation0 [shape = 'u32[]', space=smem, size = 0x4, offset = 0x4, fixed_abs, tag = 'smem constant byte address 0x4 - core index']
  #allocation1 [shape = 'u32[72,128]{1,0:T(1,128)}', space=vmem, size = 0x9000, scoped, tag = 'internal scratch']
  %s0 = inlined_call_operand.hbm [shape: f32[32,64], index: 0, kind: input, shape index: {}]
  %s1 = inlined_call_operand.hbm [shape: f32[32,64], index: 1, kind: input, shape index: {}]
  %s2 = inlined_call_operand.hbm [shape: f32[32,32], index: 2, kind: output, shape index: {}]
  %s3 = sld [smem:[#allocation0]]
  $region26: #{tpu_custom_call.1} parent=0
    _
  %s5 = ssub.s32 1, %s3
  %s6 = scalar_select 0, %s5, %s3
  $region1: #{tpu_custom_call.1} parent=0
    #allocation2 [shape = 'u8[16384]{0}', space=vmem, size = 0x4000, scoped, tag = 'input window, operand 0, single buffered']
    #allocation3 [shape = 's32[1]{0}', space=sflag, size = 0x4, scoped, tag = 'scoped memory for tpu_custom_call.1']
    #allocation4 [shape = 's32[1]{0}', space=sflag, size = 0x4, scoped, tag = 'scoped memory for tpu_custom_call.1']
    #allocation5 [shape = 'u8[16384]{0}', space=vmem, size = 0x4000, scoped, tag = 'input window, operand 1, single buffered']
    #allocation6 [shape = 's32[1]{0}', space=sflag, size = 0x4, scoped, tag = 'scoped memory for tpu_custom_call.1']
    #allocation7 [shape = 'u8[16384]{0}', space=vmem, size = 0x4000, scoped, tag = 'output window, operand 0, single buffered']
    %7 = vsyncpa [#allocation3], 0
    %8 = vsyncpa [#allocation6], 0
    %9 = vsyncpa [#allocation4], 0
    // Predicated region
    $region2: #{tpu_custom_call.1} parent=1 // pred_check
      _
    $region3: #{tpu_custom_call.1} parent=1 // pred_check_branch
      %11 = sbr.rel (0) target = $region5
    $region4: #{tpu_custom_call.1} parent=1 // pred_region
      %13 = vsyncadd [#allocation3], 0
      %s14 = sshll.u32 %s0, 4
      %s15 = int_to_ptr.hbm [resolvable:$true] %s14
      %s16 = sshll.u32 [#allocation2], 4
      %s17 = int_to_ptr.vmem [resolvable:$true] %s16
      %22 = dma.hbm_to_vmem [thread:$0]  %s15, 512, %s17, [#allocation3], 128, 128, 8
    $region5: #{tpu_custom_call.1} parent=1 // pred_fallthru
      _
    // Predicated region
    $region6: #{tpu_custom_call.1} parent=1 // pred_check
      _
    $region7: #{tpu_custom_call.1} parent=1 // pred_check_branch
      %24 = sbr.rel (0) target = $region9
    $region8: #{tpu_custom_call.1} parent=1 // pred_region
      %26 = vsyncadd [#allocation6], 0
      %s27 = sshll.u32 %s1, 4
      %s28 = int_to_ptr.hbm [resolvable:$true] %s27
      %s29 = sshll.u32 [#allocation5], 4
      %s30 = int_to_ptr.vmem [resolvable:$true] %s29
      %35 = dma.hbm_to_vmem [thread:$0]  %s28, 512, %s30, [#allocation6], 128, 128, 8
    $region9: #{tpu_custom_call.1} parent=1 // pred_fallthru
      _
    // Predicated region
    $region10: #{tpu_custom_call.1} parent=1 // pred_check
      _
    $region11: #{tpu_custom_call.1} parent=1 // pred_check_branch
      %37 = sbr.rel (0) target = $region13
    $region12: #{tpu_custom_call.1} parent=1 // pred_region
      %39 = dma.done [#allocation3], 512
    $region13: #{tpu_custom_call.1} parent=1 // pred_fallthru
      _
    // Predicated region
    $region14: #{tpu_custom_call.1} parent=1 // pred_check
      _
    $region15: #{tpu_custom_call.1} parent=1 // pred_check_branch
      %41 = sbr.rel (0) target = $region17
    $region16: #{tpu_custom_call.1} parent=1 // pred_region
      %43 = dma.done [#allocation6], 512
    $region17: #{tpu_custom_call.1} parent=1 // pred_fallthru
      _
    %v44 = vld [vmem:[#allocation2] sm:$0xff]
    %v45 = vld [vmem:[#allocation2 + $0x8] sm:$0xff]
    %v46 = vld [vmem:[#allocation2 + $0x10] sm:$0xff]
    %v47 = vld [vmem:[#allocation2 + $0x18] sm:$0xff]
    %v48 = vld [vmem:[#allocation5] sm:$0xff]
    %v49 = vld [vmem:[#allocation5 + $0x8] sm:$0xff]
    %v50 = vld [vmem:[#allocation5 + $0x10] sm:$0xff]
    %v51 = vld [vmem:[#allocation5 + $0x18] sm:$0xff]
    %vm52 = vcmask 523264
    %v54 = vsel %vm52, %v44, 0
    %v57 = vsel %vm52, %v45, 0
    %v60 = vsel %vm52, %v46, 0
    %v63 = vsel %vm52, %v47, 0
    %v66 = vsel %vm52, %v48, 0
    %v69 = vsel %vm52, %v49, 0
    %v72 = vsel %vm52, %v50, 0
    %v75 = vsel %vm52, %v51, 0
    %77 = vmatpush.xpose.msra.mxu0 0.0
    %78 = vmatpush.xpose.msra.mxu0 0.0
    %79 = vmatpush.xpose.msra.mxu0 0.0
    %80 = vmatpush.xpose.msra.mxu0 0.0
    %81 = vmatpush.xpose.msra.mxu0 0.0
    %82 = vmatpush.xpose.msra.mxu0 0.0
    %83 = vmatpush.xpose.msra.mxu0 0.0
    %84 = vmatpush.xpose.msra.mxu0 0.0
    %85 = vmatpush.xpose.msra.mxu0 0.0
    %86 = vmatpush.xpose.msra.mxu0 0.0
    %87 = vmatpush.xpose.msra.mxu0 0.0
    %88 = vmatpush.xpose.msra.mxu0 0.0
    %89 = vmatpush.xpose.msra.mxu0 %v75
    %90 = vmatpush.xpose.msra.mxu0 %v72
    %91 = vmatpush.xpose.msra.mxu0 %v69
    %92 = vmatpush.xpose.msra.mxu0 %v66
    %93 = vmatmul.f32.gmra.mxu0 %v54
    %v94 = vpop.f32.mrf.mxu0
    %v95 = vadd.f32 0.0, %v94
    %96 = vmatmul.f32.gmra.mxu0 %v57
    %v97 = vpop.f32.mrf.mxu0
    %v98 = vadd.f32 0.0, %v97
    %99 = vmatmul.f32.gmra.mxu0 %v60
    %v100 = vpop.f32.mrf.mxu0
    %v101 = vadd.f32 0.0, %v100
    %102 = vmatmul.f32.gmra.mxu0 %v63
    %v103 = vpop.f32.mrf.mxu0
    %v104 = vadd.f32 0.0, %v103
    %105 = vdwg.mxu0
    %vm106 = vcmask 261120
    %v108 = vsel %vm106, %v95, 0
    %v111 = vsel %vm106, %v98, 0
    %v114 = vsel %vm106, %v101, 0
    %v117 = vsel %vm106, %v104, 0
    %119 = vmatpush.xpose.msra.mxu0 0.0
    %120 = vmatpush.xpose.msra.mxu0 0.0
    %121 = vmatpush.xpose.msra.mxu0 0.0
    %122 = vmatpush.xpose.msra.mxu0 0.0
    %123 = vmatpush.xpose.msra.mxu0 0.0
    %124 = vmatpush.xpose.msra.mxu0 0.0
    %125 = vmatpush.xpose.msra.mxu0 0.0
    %126 = vmatpush.xpose.msra.mxu0 0.0
    %127 = vmatpush.xpose.msra.mxu0 0.0
    %128 = vmatpush.xpose.msra.mxu0 0.0
    %129 = vmatpush.xpose.msra.mxu0 0.0
    %130 = vmatpush.xpose.msra.mxu0 0.0
    %131 = vmatpush.xpose.msra.mxu0 %v117
    %132 = vmatpush.xpose.msra.mxu0 %v114
    %133 = vmatpush.xpose.msra.mxu0 %v111
    %134 = vmatpush.xpose.msra.mxu0 %v108
    %135 = vmatmul.f32.gmra.mxu0 %v108
    %v136 = vpop.f32.mrf.mxu0
    %v137 = vadd.f32 0.0, %v136
    %138 = vmatmul.f32.gmra.mxu0 %v111
    %v139 = vpop.f32.mrf.mxu0
    %v140 = vadd.f32 0.0, %v139
    %141 = vmatmul.f32.gmra.mxu0 %v114
    %v142 = vpop.f32.mrf.mxu0
    %v143 = vadd.f32 0.0, %v142
    %144 = vmatmul.f32.gmra.mxu0 %v117
    %v145 = vpop.f32.mrf.mxu0
    %v146 = vadd.f32 0.0, %v145
    %147 = vdwg.mxu0
    %148 = vst.msk [vmem:[#allocation7] sm:$0xff] %vm106, %v137
    %149 = vst.msk [vmem:[#allocation7 + $0x8] sm:$0xff] %vm106, %v140
    %150 = vst.msk [vmem:[#allocation7 + $0x10] sm:$0xff] %vm106, %v143
    %151 = vst.msk [vmem:[#allocation7 + $0x18] sm:$0xff] %vm106, %v146
    // Predicated region
    $region18: #{tpu_custom_call.1} parent=1 // pred_check
      _
    $region19: #{tpu_custom_call.1} parent=1 // pred_check_branch
      %153 = sbr.rel (0) target = $region21
    $region20: #{tpu_custom_call.1} parent=1 // pred_region
      %155 = vsyncadd [#allocation4], 0
      %s156 = sshll.u32 [#allocation7], 4
      %s157 = int_to_ptr.vmem [resolvable:$true] %s156
      %s158 = sshll.u32 %s2, 4
      %s159 = int_to_ptr.hbm [resolvable:$true] %s158
      %164 = dma.vmem_to_hbm [thread:$0]  %s157, 512, %s159, [#allocation4], 128, 128, 8
    $region21: #{tpu_custom_call.1} parent=1 // pred_fallthru
      _
    // Predicated region
    $region22: #{tpu_custom_call.1} parent=1 // pred_check
      _
    $region23: #{tpu_custom_call.1} parent=1 // pred_check_branch
      %166 = sbr.rel (0) target = $region25
    $region24: #{tpu_custom_call.1} parent=1 // pred_region
      %168 = dma.done [#allocation4], 512
    $region25: #{tpu_custom_call.1} parent=1 // pred_fallthru
      _
    %169 = vsyncpa [#allocation3], 1
    %170 = vsyncpa [#allocation6], 1
    %171 = vsyncpa [#allocation4], 1

</llo_original>
